<compile_context>
chip_gen: v7x
topology: tpu7x:2x2x1
jax: 0.10.0
libtpu: 0.0.40
codegen_flags: <defaults>
</compile_context>

<pallas_src>
import jax
import jax.numpy as jnp
from jax import lax
from jax.experimental import pallas as pl
from jax.experimental.pallas import tpu as pltpu


def autopad(k, p=None):
    # same helper the PyTorch code relies on
    if p is None:
        p = k // 2 if isinstance(k, int) else tuple(x // 2 for x in k)
    if isinstance(p, int):
        p = (p, p)
    return p


# ------------------------------ fused Pallas kernel ------------------------------

def _make_fused_kernel(C2, Cout):
    f32 = jnp.float32

    def kernel(x1_ref, x2_ref, w_ref, s_ref, b_ref, live_ref, out_ref):
        # x1_ref  : (1, Cin, H*W)        VMEM  per-image input (lane = H*W)
        # x2_ref  : (1, C2, H2*W2)       VMEM  skip tensor      (lane = H2*W2)
        # w_ref   : (4, Cout, Cin)       VMEM  one (Cout,Cin) matrix per 2x2 tap
        # s_ref   : (4, H*W, H2*W2)      VMEM  0/1 scatter incl. crop + F.pad mask
        # b_ref   : (Cout, 1)            VMEM  bias
        # live_ref: (1, H2*W2)           VMEM  1 inside the conv window, 0 in pad
        # out_ref : (1, C2+Cout, H2*W2)  VMEM  final concat([x2, conv_out])

        # fused concat: copy the skip-connection channels as one slab
        out_ref[0, :C2, :] = x2_ref[0]

        # bias only where the (cropped) conv output lands; F.pad region stays 0
        acc = b_ref[...] * live_ref[...]                       # (Cout, H2*W2)

        x = x1_ref[0].astype(f32)                              # (Cin, H*W)
        for t in range(4):                                     # 2x2 taps, unrolled
            # channel contraction at input resolution (MXU)
            y_t = jnp.dot(w_ref[t], x, preferred_element_type=f32)        # (Cout, H*W)
            # parity scatter / crop / re-pad, batched over all Cout channels (MXU)
            acc = acc + jnp.dot(y_t, s_ref[t], preferred_element_type=f32)

        out_ref[0, C2:, :] = acc.astype(out_ref.dtype)

    return kernel


# ---------------------------------- module forward --------------------------------

def conv_transpose_forward(x1, x2, weight, bias,
                           kernel_size=(2, 2), stride=(2, 2), padding=None):
    kH, kW = kernel_size
    sH, sW = stride
    assert (kH, kW) == (2, 2) and (sH, sW) == (2, 2), \
        "kernel specialised to kernel_size == stride == (2, 2)"
    # TODO(synk): generalise the parity scatter to kernel_size != stride != (2, 2).
    pH, pW = autopad((kH, kW), padding)

    N, Cin, H, W = x1.shape
    N2, C2, H2, W2 = x2.shape
    assert N2 == N
    Cout = weight.shape[1]

    # ConvTranspose2d output size (after its own `padding` crop) and the F.pad
    # amounts that stretch it back to x2's spatial size.
    OH = (H - 1) * sH - 2 * pH + kH
    OW = (W - 1) * sW - 2 * pW + kW
    padT = (H2 - OH) // 2
    padL = (W2 - OW) // 2
    assert padT >= 0 and padL >= 0, "x2 must be spatially >= the cropped conv output"
    sr = pH - padT          # shift final coords -> un-cropped 2H x 2W conv output
    sc = pW - padL

    Ctot = C2 + Cout
    HW, H2W2 = H * W, H2 * W2
    f32 = jnp.float32

    # ------------- host-side constants (hoisted out of the kernel body) -----------
    # per-tap weights: w_taps[kh*2+kw, co, ci] = weight[ci, co, kh, kw]
    w_taps = jnp.transpose(weight.astype(f32), (2, 3, 1, 0)).reshape(4, Cout, Cin)
    b_col = bias.astype(f32).reshape(Cout, 1)

    r = jnp.arange(H2)
    c = jnp.arange(W2)
    rs = jnp.maximum(r + sr, 0)
    cs = jnp.maximum(c + sc, 0)
    live_r = (r >= padT) & (r < padT + OH)
    live_c = (c >= padL) & (c < padL + OW)
    live = (live_r[:, None] & live_c[None, :]).astype(f32).reshape(1, H2W2)

    h_i = jnp.arange(H)
    w_i = jnp.arange(W)
    s_list = []
    for kh in range(2):
        Rk = (live_r[None, :] & ((rs[None, :] % 2) == kh)
              & ((rs[None, :] // 2) == h_i[:, None])).astype(f32)          # (H, H2)
        for kw in range(2):
            Ck = (live_c[None, :] & ((cs[None, :] % 2) == kw)
                  & ((cs[None, :] // 2) == w_i[:, None])).astype(f32)      # (W, W2)
            s_list.append(jnp.einsum('hr,wc->hwrc', Rk, Ck).reshape(HW, H2W2))
    scatter = jnp.stack(s_list)                                            # (4, HW, H2W2)

    # lane-dense flattened-spatial views (free reshapes)
    x1f = x1.reshape(N, Cin, HW)
    x2f = x2.reshape(N, C2, H2W2)

    kernel = _make_fused_kernel(C2, Cout)

    out_flat = pl.pallas_call(
        kernel,
        out_shape=jax.ShapeDtypeStruct((N, Ctot, H2W2), x2.dtype),
        grid_spec=pltpu.PrefetchScalarGridSpec(
            num_scalar_prefetch=0,
            grid=(N,),
            in_specs=[
                pl.BlockSpec((1, Cin, HW), lambda n: (n, 0, 0)),
                pl.BlockSpec((1, C2, H2W2), lambda n: (n, 0, 0)),
                # constants: constant index_map -> fetched once, stay resident
                pl.BlockSpec((4, Cout, Cin), lambda n: (0, 0, 0)),
                pl.BlockSpec((4, HW, H2W2), lambda n: (0, 0, 0)),
                pl.BlockSpec((Cout, 1), lambda n: (0, 0)),
                pl.BlockSpec((1, H2W2), lambda n: (0, 0)),
            ],
            out_specs=pl.BlockSpec((1, Ctot, H2W2), lambda n: (n, 0, 0)),
        ),
        compiler_params=pltpu.CompilerParams(
            dimension_semantics=("parallel",),
        ),
    )(x1f, x2f, w_taps, scatter, b_col, live)

    return out_flat.reshape(N, Ctot, H2, W2)


# -------------------------------- pure-JAX reference -------------------------------

def reference_forward(x1, x2, weight, bias,
                      kernel_size=(2, 2), stride=(2, 2), padding=None):
    kH, kW = kernel_size
    sH, sW = stride
    pH, pW = autopad((kH, kW), padding)
    # ConvTranspose2d == dilated conv with flipped & transposed kernel.
    w_t = jnp.transpose(jnp.flip(weight, (2, 3)), (1, 0, 2, 3))  # (Cout,Cin,kH,kW)
    out = lax.conv_general_dilated(
        x1, w_t, window_strides=(1, 1),
        padding=((kH - 1 - pH, kH - 1 - pH), (kW - 1 - pW, kW - 1 - pW)),
        lhs_dilation=(sH, sW),
        dimension_numbers=("NCHW", "OIHW", "NCHW"))
    out = out + bias[None, :, None, None]
    H2, W2 = x2.shape[2], x2.shape[3]
    diffY = H2 - out.shape[2]
    diffX = W2 - out.shape[3]
    out = jnp.pad(out, ((0, 0), (0, 0),
                        (diffY // 2, diffY - diffY // 2),
                        (diffX // 2, diffX - diffX // 2)))
    return jnp.concatenate([x2, out], axis=1)


# --------------------------------------- main --------------------------------------

if __name__ == "__main__":
    key = jax.random.PRNGKey(0)
    k1, k2, k3, k4 = jax.random.split(key, 4)

    N, Cin, H, W = 2, 4, 8, 8          # x1 spatial 8x8 -> output spatial 16x16
    Cout = 4
    x1 = jax.random.normal(k1, (N, Cin, H, W), jnp.float32)
    x2 = jax.random.normal(k2, (N, Cin, 2 * H, 2 * W), jnp.float32)  # U-Net skip

    # ConvTranspose2d parameter shapes: weight (in, out, kH, kW), bias (out,)
    weight = 0.1 * jax.random.normal(k3, (Cin, Cout, 2, 2), jnp.float32)
    bias = 0.1 * jax.random.normal(k4, (Cout,), jnp.float32)

    out = conv_transpose_forward(x1, x2, weight, bias)
    out = jax.block_until_ready(out)

    assert out.shape == (N, Cin + Cout, 2 * H, 2 * W), out.shape
    ref = reference_forward(x1, x2, weight, bias)
    max_err = float(jnp.max(jnp.abs(out - ref)))
    assert max_err < 5e-4, f"max abs error {max_err}"

    print("KERNEL_OK")
</pallas_src>

<mosaic_0001>
module attributes {stable_mosaic.version = 11 : i64} {
  func.func @kernel(%arg0: i32, %arg1: memref<1x4x64xf32, #tpu.memory_space<vmem>>, %arg2: memref<1x4x256xf32, #tpu.memory_space<vmem>>, %arg3: memref<4x4x4xf32, #tpu.memory_space<vmem>>, %arg4: memref<4x64x256xf32, #tpu.memory_space<vmem>>, %arg5: memref<4x1xf32, #tpu.memory_space<vmem>>, %arg6: memref<1x256xf32, #tpu.memory_space<vmem>>, %arg7: memref<1x8x256xf32, #tpu.memory_space<vmem>>) attributes {dimension_semantics = [#tpu.dimension_semantics<parallel>], iteration_bounds = array<i64: 2>, scalar_prefetch = 0 : i64, scratch_operands = 0 : i64, tpu.core_type = #tpu.core_type<tc>, window_params = [{transform_indices = @transform_0, window_bounds = array<i64: 1, 4, 64>}, {transform_indices = @transform_1, window_bounds = array<i64: 1, 4, 256>}, {pipeline_mode = #tpu.pipeline_mode<synchronous>, transform_indices = @transform_2, window_bounds = array<i64: 4, 4, 4>}, {pipeline_mode = #tpu.pipeline_mode<synchronous>, transform_indices = @transform_3, window_bounds = array<i64: 4, 64, 256>}, {pipeline_mode = #tpu.pipeline_mode<synchronous>, transform_indices = @transform_4, window_bounds = array<i64: 4, 1>}, {pipeline_mode = #tpu.pipeline_mode<synchronous>, transform_indices = @transform_5, window_bounds = array<i64: 1, 256>}, {transform_indices = @transform_6, window_bounds = array<i64: 1, 8, 256>}]} {
    %c0 = arith.constant 0 : index
    %c0_0 = arith.constant 0 : index
    %c0_1 = arith.constant 0 : index
    %0 = vector.load %arg2[%c0, %c0_0, %c0_1] : memref<1x4x256xf32, #tpu.memory_space<vmem>>, vector<1x4x256xf32>
    %1 = vector.shape_cast %0 : vector<1x4x256xf32> to vector<4x256xf32>
    %c0_2 = arith.constant 0 : index
    %c0_3 = arith.constant 0 : index
    %c0_4 = arith.constant 0 : index
    %2 = vector.load %arg7[%c0_2, %c0_3, %c0_4] : memref<1x8x256xf32, #tpu.memory_space<vmem>>, vector<1x4x256xf32>
    %3 = vector.shape_cast %2 : vector<1x4x256xf32> to vector<4x256xf32>
    %4 = vector.shape_cast %1 : vector<4x256xf32> to vector<1x4x256xf32>
    tpu.vector_store %arg7[%c0_2, %c0_3, %c0_4], %4 {strides = array<i32>} : memref<1x8x256xf32, #tpu.memory_space<vmem>>, vector<1x4x256xf32>,
    %c0_5 = arith.constant 0 : index
    %c0_6 = arith.constant 0 : index
    %5 = vector.load %arg5[%c0_5, %c0_6] : memref<4x1xf32, #tpu.memory_space<vmem>>, vector<4x1xf32>
    %c0_7 = arith.constant 0 : index
    %c0_8 = arith.constant 0 : index
    %6 = vector.load %arg6[%c0_7, %c0_8] : memref<1x256xf32, #tpu.memory_space<vmem>>, vector<1x256xf32>
    %7 = vector.broadcast %5 : vector<4x1xf32> to vector<4x256xf32>
    %8 = vector.broadcast %6 : vector<1x256xf32> to vector<4x256xf32>
    %9 = arith.mulf %7, %8 : vector<4x256xf32>
    %c0_9 = arith.constant 0 : index
    %c0_10 = arith.constant 0 : index
    %c0_11 = arith.constant 0 : index
    %10 = vector.load %arg1[%c0_9, %c0_10, %c0_11] : memref<1x4x64xf32, #tpu.memory_space<vmem>>, vector<1x4x64xf32>
    %11 = vector.shape_cast %10 : vector<1x4x64xf32> to vector<4x64xf32>
    %c0_12 = arith.constant 0 : index
    %c0_13 = arith.constant 0 : index
    %c0_14 = arith.constant 0 : index
    %12 = vector.load %arg3[%c0_12, %c0_13, %c0_14] : memref<4x4x4xf32, #tpu.memory_space<vmem>>, vector<1x4x4xf32>
    %13 = vector.shape_cast %12 : vector<1x4x4xf32> to vector<4x4xf32>
    %cst = arith.constant dense<0.000000e+00> : vector<4x64xf32>
    %14 = tpu.matmul %13, %11, %cst {dimension_numbers = #tpu.dot_dimension_numbers<[1], [0], [0], [1], [0, 0, 1, 1], [], []>} : vector<4x4xf32>, vector<4x64xf32>, vector<4x64xf32> -> vector<4x64xf32>
    %c0_15 = arith.constant 0 : index
    %c0_16 = arith.constant 0 : index
    %c0_17 = arith.constant 0 : index
    %15 = vector.load %arg4[%c0_15, %c0_16, %c0_17] : memref<4x64x256xf32, #tpu.memory_space<vmem>>, vector<1x64x256xf32>
    %16 = vector.shape_cast %15 : vector<1x64x256xf32> to vector<64x256xf32>
    %cst_18 = arith.constant dense<0.000000e+00> : vector<4x256xf32>
    %17 = tpu.matmul %14, %16, %cst_18 {dimension_numbers = #tpu.dot_dimension_numbers<[1], [0], [0], [1], [0, 0, 1, 1], [], []>} : vector<4x64xf32>, vector<64x256xf32>, vector<4x256xf32> -> vector<4x256xf32>
    %18 = arith.addf %9, %17 : vector<4x256xf32>
    %c1 = arith.constant 1 : index
    %c0_19 = arith.constant 0 : index
    %c0_20 = arith.constant 0 : index
    %19 = vector.load %arg3[%c1, %c0_19, %c0_20] : memref<4x4x4xf32, #tpu.memory_space<vmem>>, vector<1x4x4xf32>
    %20 = vector.shape_cast %19 : vector<1x4x4xf32> to vector<4x4xf32>
    %cst_21 = arith.constant dense<0.000000e+00> : vector<4x64xf32>
    %21 = tpu.matmul %20, %11, %cst_21 {dimension_numbers = #tpu.dot_dimension_numbers<[1], [0], [0], [1], [0, 0, 1, 1], [], []>} : vector<4x4xf32>, vector<4x64xf32>, vector<4x64xf32> -> vector<4x64xf32>
    %c1_22 = arith.constant 1 : index
    %c0_23 = arith.constant 0 : index
    %c0_24 = arith.constant 0 : index
    %22 = vector.load %arg4[%c1_22, %c0_23, %c0_24] : memref<4x64x256xf32, #tpu.memory_space<vmem>>, vector<1x64x256xf32>
    %23 = vector.shape_cast %22 : vector<1x64x256xf32> to vector<64x256xf32>
    %cst_25 = arith.constant dense<0.000000e+00> : vector<4x256xf32>
    %24 = tpu.matmul %21, %23, %cst_25 {dimension_numbers = #tpu.dot_dimension_numbers<[1], [0], [0], [1], [0, 0, 1, 1], [], []>} : vector<4x64xf32>, vector<64x256xf32>, vector<4x256xf32> -> vector<4x256xf32>
    %25 = arith.addf %18, %24 : vector<4x256xf32>
    %c2 = arith.constant 2 : index
    %c0_26 = arith.constant 0 : index
    %c0_27 = arith.constant 0 : index
    %26 = vector.load %arg3[%c2, %c0_26, %c0_27] : memref<4x4x4xf32, #tpu.memory_space<vmem>>, vector<1x4x4xf32>
    %27 = vector.shape_cast %26 : vector<1x4x4xf32> to vector<4x4xf32>
    %cst_28 = arith.constant dense<0.000000e+00> : vector<4x64xf32>
    %28 = tpu.matmul %27, %11, %cst_28 {dimension_numbers = #tpu.dot_dimension_numbers<[1], [0], [0], [1], [0, 0, 1, 1], [], []>} : vector<4x4xf32>, vector<4x64xf32>, vector<4x64xf32> -> vector<4x64xf32>
    %c2_29 = arith.constant 2 : index
    %c0_30 = arith.constant 0 : index
    %c0_31 = arith.constant 0 : index
    %29 = vector.load %arg4[%c2_29, %c0_30, %c0_31] : memref<4x64x256xf32, #tpu.memory_space<vmem>>, vector<1x64x256xf32>
    %30 = vector.shape_cast %29 : vector<1x64x256xf32> to vector<64x256xf32>
    %cst_32 = arith.constant dense<0.000000e+00> : vector<4x256xf32>
    %31 = tpu.matmul %28, %30, %cst_32 {dimension_numbers = #tpu.dot_dimension_numbers<[1], [0], [0], [1], [0, 0, 1, 1], [], []>} : vector<4x64xf32>, vector<64x256xf32>, vector<4x256xf32> -> vector<4x256xf32>
    %32 = arith.addf %25, %31 : vector<4x256xf32>
    %c3 = arith.constant 3 : index
    %c0_33 = arith.constant 0 : index
    %c0_34 = arith.constant 0 : index
    %33 = vector.load %arg3[%c3, %c0_33, %c0_34] : memref<4x4x4xf32, #tpu.memory_space<vmem>>, vector<1x4x4xf32>
    %34 = vector.shape_cast %33 : vector<1x4x4xf32> to vector<4x4xf32>
    %cst_35 = arith.constant dense<0.000000e+00> : vector<4x64xf32>
    %35 = tpu.matmul %34, %11, %cst_35 {dimension_numbers = #tpu.dot_dimension_numbers<[1], [0], [0], [1], [0, 0, 1, 1], [], []>} : vector<4x4xf32>, vector<4x64xf32>, vector<4x64xf32> -> vector<4x64xf32>
    %c3_36 = arith.constant 3 : index
    %c0_37 = arith.constant 0 : index
    %c0_38 = arith.constant 0 : index
    %36 = vector.load %arg4[%c3_36, %c0_37, %c0_38] : memref<4x64x256xf32, #tpu.memory_space<vmem>>, vector<1x64x256xf32>
    %37 = vector.shape_cast %36 : vector<1x64x256xf32> to vector<64x256xf32>
    %cst_39 = arith.constant dense<0.000000e+00> : vector<4x256xf32>
    %38 = tpu.matmul %35, %37, %cst_39 {dimension_numbers = #tpu.dot_dimension_numbers<[1], [0], [0], [1], [0, 0, 1, 1], [], []>} : vector<4x64xf32>, vector<64x256xf32>, vector<4x256xf32> -> vector<4x256xf32>
    %39 = arith.addf %32, %38 : vector<4x256xf32>
    %c0_40 = arith.constant 0 : index
    %c4 = arith.constant 4 : index
    %c0_41 = arith.constant 0 : index
    %40 = vector.load %arg7[%c0_40, %c4, %c0_41] : memref<1x8x256xf32, #tpu.memory_space<vmem>>, vector<1x4x256xf32>
    %41 = vector.shape_cast %40 : vector<1x4x256xf32> to vector<4x256xf32>
    %42 = vector.shape_cast %39 : vector<4x256xf32> to vector<1x4x256xf32>
    tpu.vector_store %arg7[%c0_40, %c4, %c0_41], %42 {strides = array<i32>} : memref<1x8x256xf32, #tpu.memory_space<vmem>>, vector<1x4x256xf32>,
    return
  }
  func.func @transform_0(%arg0: i32) -> (i32, i32, i32) {
    %c0_i32 = arith.constant 0 : i32
    %c0_i32_0 = arith.constant 0 : i32
    %c0_i32_1 = arith.constant 0 : i32
    return %arg0, %c0_i32, %c0_i32_0 : i32, i32, i32
  }
  func.func @transform_1(%arg0: i32) -> (i32, i32, i32) {
    %c0_i32 = arith.constant 0 : i32
    %c0_i32_0 = arith.constant 0 : i32
    %c0_i32_1 = arith.constant 0 : i32
    return %arg0, %c0_i32, %c0_i32_0 : i32, i32, i32
  }
  func.func @transform_2(%arg0: i32) -> (i32, i32, i32) {
    %c0_i32 = arith.constant 0 : i32
    %c0_i32_0 = arith.constant 0 : i32
    %c0_i32_1 = arith.constant 0 : i32
    %c0_i32_2 = arith.constant 0 : i32
    return %c0_i32, %c0_i32_0, %c0_i32_1 : i32, i32, i32
  }
  func.func @transform_3(%arg0: i32) -> (i32, i32, i32) {
    %c0_i32 = arith.constant 0 : i32
    %c0_i32_0 = arith.constant 0 : i32
    %c0_i32_1 = arith.constant 0 : i32
    %c0_i32_2 = arith.constant 0 : i32
    return %c0_i32, %c0_i32_0, %c0_i32_1 : i32, i32, i32
  }
  func.func @transform_4(%arg0: i32) -> (i32, i32) {
    %c0_i32 = arith.constant 0 : i32
    %c0_i32_0 = arith.constant 0 : i32
    %c0_i32_1 = arith.constant 0 : i32
    return %c0_i32, %c0_i32_0 : i32, i32
  }
  func.func @transform_5(%arg0: i32) -> (i32, i32) {
    %c0_i32 = arith.constant 0 : i32
    %c0_i32_0 = arith.constant 0 : i32
    %c0_i32_1 = arith.constant 0 : i32
    return %c0_i32, %c0_i32_0 : i32, i32
  }
  func.func @transform_6(%arg0: i32) -> (i32, i32, i32) {
    %c0_i32 = arith.constant 0 : i32
    %c0_i32_0 = arith.constant 0 : i32
    %c0_i32_1 = arith.constant 0 : i32
    return %arg0, %c0_i32, %c0_i32_0 : i32, i32, i32
  }
}

</mosaic_0001>

<llo_original>
// kernel: tpu_custom_call.1
$region0: #{tpu_custom_call.1}
  #allocation0 [shape = 'u32[]', space=smem, size = 0x4, offset = 0x4, fixed_abs, tag = 'smem constant byte address 0x4 - core index']
  #allocation1 [shape = 'u32[144,128]{1,0:T(1,128)}', space=vmem, size = 0x12000, scoped, tag = 'internal scratch']
  %s0 = inlined_call_operand.hbm [shape: f32[2,4,64], index: 0, kind: input, shape index: {}]
  %s1 = inlined_call_operand.hbm [shape: f32[2,4,256], index: 1, kind: input, shape index: {}]
  %s2 = inlined_call_operand.hbm [shape: f32[4,4,4], index: 2, kind: input, shape index: {}]
  %s3 = inlined_call_operand.hbm [shape: f32[4,64,256], index: 3, kind: input, shape index: {}]
  %s4 = inlined_call_operand.vmem [shape: f32[4,1], index: 4, kind: input, shape index: {}]
  %s5 = inlined_call_operand.vmem [shape: f32[1,256], index: 5, kind: input, shape index: {}]
  %s6 = inlined_call_operand.hbm [shape: f32[2,8,256], index: 6, kind: output, shape index: {}]
  %s7 = sld [smem:[#allocation0]]
  $region73: #{tpu_custom_call.1} parent=0
    _
  %s9 = ssub.s32 1, %s7
  %s10 = scalar_select 0, %s9, %s7
  $region1: #{tpu_custom_call.1} parent=0
    #allocation2 [shape = 'u8[4096]{0}', space=vmem, size = 0x1000, scoped, tag = 'input window, operand 0']
    #allocation3 [shape = 's32[2]{0}', space=sflag, size = 0x8, scoped, tag = 'scoped memory for tpu_custom_call.1']
    #allocation4 [shape = 's32[2]{0}', space=sflag, size = 0x8, scoped, tag = 'scoped memory for tpu_custom_call.1']
    #allocation5 [shape = 'u8[8192]{0}', space=vmem, size = 0x2000, scoped, tag = 'input window, operand 1']
    #allocation6 [shape = 's32[2]{0}', space=sflag, size = 0x8, scoped, tag = 'scoped memory for tpu_custom_call.1']
    #allocation7 [shape = 'u8[8192]{0}', space=vmem, size = 0x2000, scoped, tag = 'input window, operand 2, single buffered']
    #allocation8 [shape = 'u8[262144]{0}', space=vmem, size = 0x40000, scoped, tag = 'input window, operand 3, single buffered']
    #allocation9 [shape = 's32[1]{0}', space=sflag, size = 0x4, scoped, tag = 'scoped memory for tpu_custom_call.1']
    #allocation10 [shape = 'u8[16384]{0}', space=vmem, size = 0x4000, scoped, tag = 'output window, operand 0']
    %11 = vsyncpa [#allocation3], 0
    %s12 = scalar_lea.sflag [#allocation3], 1
    %13 = vsyncpa %s12, 0
    %14 = vsyncpa [#allocation6], 0
    %s15 = scalar_lea.sflag [#allocation6], 1
    %16 = vsyncpa %s15, 0
    %17 = vsyncpa [#allocation9], 0
    %18 = vsyncpa [#allocation4], 0
    %s19 = scalar_lea.sflag [#allocation4], 1
    %20 = vsyncpa %s19, 0
    loop: start=0, step=1, limit=4
    $region2: #{tpu_custom_call.1} parent=1 // loop_pre_header
      _
    $region3: #{tpu_custom_call.1} parent=1 // loop_header
      %s22 = sphi 0, %s26
      %p23 = scmp.ge.s32.totalorder %s22, 4
      %s32 = sphi 0, %s34
      %s35 = sphi 0, %s32
      %s36 = sphi 0, %s35
      %s52 = sphi 0, %s36
      %s58 = sphi 0, %s60
      %s61 = sphi 0, %s58
      %s62 = sphi 0, %s61
      %s78 = sphi 0, %s62
      %s82 = sphi 0, %s82
      %s84 = sphi 0, %s82
      %s85 = sphi 0, %s84
      %s99 = sphi 0, %s85
      %s103 = sphi 0, %s103
      %s105 = sphi 0, %s103
      %s106 = sphi 0, %s105
      %s120 = sphi 0, %s106
      %s124 = sphi 0, %s124
      %s126 = sphi 0, %s124
      %s127 = sphi 0, %s126
      %s141 = sphi 0, %s127
      %s145 = sphi 0, %s145
      %s147 = sphi 0, %s145
      %s148 = sphi 0, %s147
      %s162 = sphi 0, %s148
      %s168 = sphi 0, %s170
      %s171 = sphi 0, %s168
      %s172 = sphi 0, %s171
      %s188 = sphi 0, %s172
    $region4: #{tpu_custom_call.1} parent=1 // loop_header_branch
      %25 = sbr.rel (%p23) target = $region8
    $region5: #{tpu_custom_call.1} parent=1 // loop_body
      %s27 = ssub.s32 %s22, 1
      %s28 = ssub.s32 %s22, 2
      %s29 = sadd.s32 %s22, 1
      %s30 = ssub.s32 %s22, %s29
      %p31 = scmp.eq.s32.totalorder %s30, 0
      %s33 = sadd.s32 %s32, 1
      %s34 = scalar_select %p31, %s32, %s33
      %p37 = pneg %p31
      %p38 = scmp.eq.s32.totalorder %s22, 1
      %p39 = por %p37, %p38
      %p40 = scmp.ne.s32.totalorder %s32, %s35
      %p41 = scmp.eq.s32.totalorder %s22, 0
      %p42 = por %p40, %p41
      %p43 = scmp.ne.s32.totalorder %s32, %s35
      %p44 = scmp.eq.s32.totalorder %s27, 1
      %p45 = por %p43, %p44
      %p46 = scmp.ne.s32.totalorder %s35, %s36
      %p47 = scmp.eq.s32.totalorder %s27, 0
      %p48 = por %p46, %p47
      %p49 = scmp.ne.s32.totalorder %s35, %s36
      %p50 = scmp.eq.s32.totalorder %s28, 1
      %p51 = por %p49, %p50
      %p53 = scmp.ne.s32.totalorder %s36, %s52
      %p54 = scmp.eq.s32.totalorder %s28, 0
      %p55 = por %p53, %p54
      %s56 = ssub.s32 %s22, %s29
      %p57 = scmp.eq.s32.totalorder %s56, 0
      %s59 = sadd.s32 %s58, 1
      %s60 = scalar_select %p57, %s58, %s59
      %p63 = pneg %p57
      %p64 = scmp.eq.s32.totalorder %s22, 1
      %p65 = por %p63, %p64
      %p66 = scmp.ne.s32.totalorder %s58, %s61
      %p67 = scmp.eq.s32.totalorder %s22, 0
      %p68 = por %p66, %p67
      %p69 = scmp.ne.s32.totalorder %s58, %s61
      %p70 = scmp.eq.s32.totalorder %s27, 1
      %p71 = por %p69, %p70
      %p72 = scmp.ne.s32.totalorder %s61, %s62
      %p73 = scmp.eq.s32.totalorder %s27, 0
      %p74 = por %p72, %p73
      %p75 = scmp.ne.s32.totalorder %s61, %s62
      %p76 = scmp.eq.s32.totalorder %s28, 1
      %p77 = por %p75, %p76
      %p79 = scmp.ne.s32.totalorder %s62, %s78
      %p80 = scmp.eq.s32.totalorder %s28, 0
      %p81 = por %p79, %p80
      %s83 = sadd.s32 %s82, 1
      %p86 = scmp.eq.s32.totalorder %s22, 1
      %p87 = scmp.ne.s32.totalorder %s82, %s84
      %p88 = scmp.eq.s32.totalorder %s22, 0
      %p89 = por %p87, %p88
      %p90 = scmp.ne.s32.totalorder %s82, %s84
      %p91 = scmp.eq.s32.totalorder %s27, 1
      %p92 = por %p90, %p91
      %p93 = scmp.ne.s32.totalorder %s84, %s85
      %p94 = scmp.eq.s32.totalorder %s27, 0
      %p95 = por %p93, %p94
      %p96 = scmp.ne.s32.totalorder %s84, %s85
      %p97 = scmp.eq.s32.totalorder %s28, 1
      %p98 = por %p96, %p97
      %p100 = scmp.ne.s32.totalorder %s85, %s99
      %p101 = scmp.eq.s32.totalorder %s28, 0
      %p102 = por %p100, %p101
      %s104 = sadd.s32 %s103, 1
      %p107 = scmp.eq.s32.totalorder %s22, 1
      %p108 = scmp.ne.s32.totalorder %s103, %s105
      %p109 = scmp.eq.s32.totalorder %s22, 0
      %p110 = por %p108, %p109
      %p111 = scmp.ne.s32.totalorder %s103, %s105
      %p112 = scmp.eq.s32.totalorder %s27, 1
      %p113 = por %p111, %p112
      %p114 = scmp.ne.s32.totalorder %s105, %s106
      %p115 = scmp.eq.s32.totalorder %s27, 0
      %p116 = por %p114, %p115
      %p117 = scmp.ne.s32.totalorder %s105, %s106
      %p118 = scmp.eq.s32.totalorder %s28, 1
      %p119 = por %p117, %p118
      %p121 = scmp.ne.s32.totalorder %s106, %s120
      %p122 = scmp.eq.s32.totalorder %s28, 0
      %p123 = por %p121, %p122
      %s125 = sadd.s32 %s124, 1
      %p128 = scmp.eq.s32.totalorder %s22, 1
      %p129 = scmp.ne.s32.totalorder %s124, %s126
      %p130 = scmp.eq.s32.totalorder %s22, 0
      %p131 = por %p129, %p130
      %p132 = scmp.ne.s32.totalorder %s124, %s126
      %p133 = scmp.eq.s32.totalorder %s27, 1
      %p134 = por %p132, %p133
      %p135 = scmp.ne.s32.totalorder %s126, %s127
      %p136 = scmp.eq.s32.totalorder %s27, 0
      %p137 = por %p135, %p136
      %p138 = scmp.ne.s32.totalorder %s126, %s127
      %p139 = scmp.eq.s32.totalorder %s28, 1
      %p140 = por %p138, %p139
      %p142 = scmp.ne.s32.totalorder %s127, %s141
      %p143 = scmp.eq.s32.totalorder %s28, 0
      %p144 = por %p142, %p143
      %s146 = sadd.s32 %s145, 1
      %p149 = scmp.eq.s32.totalorder %s22, 1
      %p150 = scmp.ne.s32.totalorder %s145, %s147
      %p151 = scmp.eq.s32.totalorder %s22, 0
      %p152 = por %p150, %p151
      %p153 = scmp.ne.s32.totalorder %s145, %s147
      %p154 = scmp.eq.s32.totalorder %s27, 1
      %p155 = por %p153, %p154
      %p156 = scmp.ne.s32.totalorder %s147, %s148
      %p157 = scmp.eq.s32.totalorder %s27, 0
      %p158 = por %p156, %p157
      %p159 = scmp.ne.s32.totalorder %s147, %s148
      %p160 = scmp.eq.s32.totalorder %s28, 1
      %p161 = por %p159, %p160
      %p163 = scmp.ne.s32.totalorder %s148, %s162
      %p164 = scmp.eq.s32.totalorder %s28, 0
      %p165 = por %p163, %p164
      %s166 = ssub.s32 %s22, %s29
      %p167 = scmp.eq.s32.totalorder %s166, 0
      %s169 = sadd.s32 %s168, 1
      %s170 = scalar_select %p167, %s168, %s169
      %p173 = pneg %p167
      %p174 = scmp.eq.s32.totalorder %s22, 1
      %p175 = por %p173, %p174
      %p176 = scmp.ne.s32.totalorder %s168, %s171
      %p177 = scmp.eq.s32.totalorder %s22, 0
      %p178 = por %p176, %p177
      %p179 = scmp.ne.s32.totalorder %s168, %s171
      %p180 = scmp.eq.s32.totalorder %s27, 1
      %p181 = por %p179, %p180
      %p182 = scmp.ne.s32.totalorder %s171, %s172
      %p183 = scmp.eq.s32.totalorder %s27, 0
      %p184 = por %p182, %p183
      %p185 = scmp.ne.s32.totalorder %s171, %s172
      %p186 = scmp.eq.s32.totalorder %s28, 1
      %p187 = por %p185, %p186
      %p189 = scmp.ne.s32.totalorder %s172, %s188
      %p190 = scmp.eq.s32.totalorder %s28, 0
      %p191 = por %p189, %p190
      %p192 = scmp.le.s32.totalorder 1, %s22
      %p193 = scmp.lt.s32.totalorder %s22, 3
      %p194 = pnand %p192, %p193
      %p195 = pneg %p194
      // Predicated region
      $region9: #{tpu_custom_call.1} parent=5 // pred_check
        _
      $region10: #{tpu_custom_call.1} parent=5 // pred_check_branch
        %197 = sbr.rel (%p194) target = $region12
      $region11: #{tpu_custom_call.1} parent=5 // pred_region
        %s198 = ssub.s32 %s22, 1
        // Predicated region
        $region13: #{tpu_custom_call.1} parent=11 // pred_check
          %p199 = pneg %p95
        $region14: #{tpu_custom_call.1} parent=11 // pred_check_branch
          %201 = sbr.rel (%p199) target = $region16
        $region15: #{tpu_custom_call.1} parent=11 // pred_region
          %s203 = ssub.s32 256, 256
          %204 = vsyncadd [#allocation6], %s203
          %s205 = sshll.u32 [#allocation7], 4
          %s206 = int_to_ptr.vmem [resolvable:$true] %s205
          %211 = dma.hbm_to_vmem [thread:$0]  %s2, 256, %s206, [#allocation6], 64, 64, 4
        $region16: #{tpu_custom_call.1} parent=11 // pred_fallthru
          _
        // Predicated region
        $region17: #{tpu_custom_call.1} parent=11 // pred_check
          %p212 = pneg %p116
        $region18: #{tpu_custom_call.1} parent=11 // pred_check_branch
          %214 = sbr.rel (%p212) target = $region20
        $region19: #{tpu_custom_call.1} parent=11 // pred_region
          %s216 = ssub.s32 8192, 8192
          %217 = vsyncadd [#allocation9], %s216
          %s218 = sshll.u32 [#allocation8], 4
          %s219 = int_to_ptr.vmem [resolvable:$true] %s218
          %224 = dma.hbm_to_vmem [thread:$0]  %s3, 8192, %s219, [#allocation9], 256, 256, 16
        $region20: #{tpu_custom_call.1} parent=11 // pred_fallthru
          _
        // Predicated region
        $region21: #{tpu_custom_call.1} parent=11 // pred_check
          %p225 = pneg %p137
        $region22: #{tpu_custom_call.1} parent=11 // pred_check_branch
          %227 = sbr.rel (%p225) target = $region24
        $region23: #{tpu_custom_call.1} parent=11 // pred_region
          _
        $region24: #{tpu_custom_call.1} parent=11 // pred_fallthru
          _
        // Predicated region
        $region25: #{tpu_custom_call.1} parent=11 // pred_check
          %p228 = pneg %p158
        $region26: #{tpu_custom_call.1} parent=11 // pred_check_branch
          %230 = sbr.rel (%p228) target = $region28
        $region27: #{tpu_custom_call.1} parent=11 // pred_region
          _
        $region28: #{tpu_custom_call.1} parent=11 // pred_fallthru
          _
      $region12: #{tpu_custom_call.1} parent=5 // pred_fallthru
        _
      %p231 = scmp.lt.s32.totalorder %s22, 2
      // Predicated region
      $region29: #{tpu_custom_call.1} parent=5 // pred_check
        %p232 = pneg %p231
      $region30: #{tpu_custom_call.1} parent=5 // pred_check_branch
        %234 = sbr.rel (%p232) target = $region32
      $region31: #{tpu_custom_call.1} parent=5 // pred_region
        // Predicated region
        $region33: #{tpu_custom_call.1} parent=31 // pred_check
          %p235 = pneg %p42
        $region34: #{tpu_custom_call.1} parent=31 // pred_check_branch
          %237 = sbr.rel (%p235) target = $region36
        $region35: #{tpu_custom_call.1} parent=31 // pred_region
          %s238 = sand.u32 %s32, 1
          %s239 = scalar_lea.sflag [#allocation3], %s238
          %s240 = sand.u32 %s32, 1
          %s241 = smul.addr %s240, 4
          %s242 = scalar_lea.vmem [#allocation2], %s241
          %s244 = ssub.s32 64, 64
          %245 = vsyncadd %s239, %s244
          %s246 = smul.addr %s22, 64
          %s247 = scalar_lea.hbm %s0, %s246
          %s249 = sshll.u32 %s242, 4
          %s250 = int_to_ptr.vmem [resolvable:$true] %s249
          %252 = dma.hbm_to_vmem [thread:$0]  %s247, 64, %s250, %s239
        $region36: #{tpu_custom_call.1} parent=31 // pred_fallthru
          _
        // Predicated region
        $region37: #{tpu_custom_call.1} parent=31 // pred_check
          %p253 = pneg %p68
        $region38: #{tpu_custom_call.1} parent=31 // pred_check_branch
          %255 = sbr.rel (%p253) target = $region40
        $region39: #{tpu_custom_call.1} parent=31 // pred_region
          %s256 = sand.u32 %s22, 1
          %s257 = scalar_lea.sflag [#allocation6], %s256
          %s258 = sand.u32 %s58, 1
          %s259 = smul.addr %s258, 8
          %s260 = scalar_lea.vmem [#allocation5], %s259
          %s262 = ssub.s32 128, 128
          %263 = vsyncadd %s257, %s262
          %s264 = smul.addr %s22, 2
          %s265 = smul.addr %s264, 64
          %s266 = scalar_lea.hbm %s1, %s265
          %s268 = sshll.u32 %s260, 4
          %s269 = int_to_ptr.vmem [resolvable:$true] %s268
          %271 = dma.hbm_to_vmem [thread:$0]  %s266, 128, %s269, %s257
        $region40: #{tpu_custom_call.1} parent=31 // pred_fallthru
          _
      $region32: #{tpu_custom_call.1} parent=5 // pred_fallthru
        _
      %p272 = scmp.le.s32.totalorder 1, %s22
      %p273 = scmp.lt.s32.totalorder %s22, 3
      %p274 = pnand %p272, %p273
      %p275 = pneg %p274
      // Predicated region
      $region41: #{tpu_custom_call.1} parent=5 // pred_check
        _
      $region42: #{tpu_custom_call.1} parent=5 // pred_check_branch
        %277 = sbr.rel (%p274) target = $region44
      $region43: #{tpu_custom_call.1} parent=5 // pred_region
        %s278 = ssub.s32 %s22, 1
        %s279 = sand.u32 %s35, 1
        %s280 = scalar_lea.sflag [#allocation3], %s279
        %s281 = sand.u32 %s35, 1
        %s282 = smul.addr %s281, 4
        %s283 = scalar_lea.vmem [#allocation2], %s282
        // Predicated region
        $region45: #{tpu_custom_call.1} parent=43 // pred_check
          %p284 = pneg %p48
        $region46: #{tpu_custom_call.1} parent=43 // pred_check_branch
          %286 = sbr.rel (%p284) target = $region48
        $region47: #{tpu_custom_call.1} parent=43 // pred_region
          %287 = dma.done %s280, 64
        $region48: #{tpu_custom_call.1} parent=43 // pred_fallthru
          _
        %s288 = sand.u32 %s27, 1
        %s289 = scalar_lea.sflag [#allocation6], %s288
        %s290 = sand.u32 %s61, 1
        %s291 = smul.addr %s290, 8
        %s292 = scalar_lea.vmem [#allocation5], %s291
        // Predicated region
        $region49: #{tpu_custom_call.1} parent=43 // pred_check
          %p293 = pneg %p74
        $region50: #{tpu_custom_call.1} parent=43 // pred_check_branch
          %295 = sbr.rel (%p293) target = $region52
        $region51: #{tpu_custom_call.1} parent=43 // pred_region
          %296 = dma.done %s289, 128
        $region52: #{tpu_custom_call.1} parent=43 // pred_fallthru
          _
        // Predicated region
        $region53: #{tpu_custom_call.1} parent=43 // pred_check
          %p297 = pneg %p95
        $region54: #{tpu_custom_call.1} parent=43 // pred_check_branch
          %299 = sbr.rel (%p297) target = $region56
        $region55: #{tpu_custom_call.1} parent=43 // pred_region
          %300 = dma.done [#allocation6], 256
        $region56: #{tpu_custom_call.1} parent=43 // pred_fallthru
          _
        // Predicated region
        $region57: #{tpu_custom_call.1} parent=43 // pred_check
          %p301 = pneg %p116
        $region58: #{tpu_custom_call.1} parent=43 // pred_check_branch
          %303 = sbr.rel (%p301) target = $region60
        $region59: #{tpu_custom_call.1} parent=43 // pred_region
          %304 = dma.done [#allocation9], 8192
        $region60: #{tpu_custom_call.1} parent=43 // pred_fallthru
          _
        %s305 = sand.u32 %s35, 1
        %s306 = scalar_lea.sflag [#allocation3], %s305
        %s307 = sand.u32 %s35, 1
        %s308 = smul.addr %s307, 4
        %s309 = scalar_lea.vmem [#allocation2], %s308
        %p310 = pneg %p48
        %p311 = pneg %p45
        %s312 = sand.u32 %s27, 1
        %s313 = scalar_lea.sflag [#allocation6], %s312
        %s314 = sand.u32 %s61, 1
        %s315 = smul.addr %s314, 8
        %s316 = scalar_lea.vmem [#allocation5], %s315
        %p317 = pneg %p74
        %p318 = pneg %p71
        %p319 = pneg %p95
        %p320 = pneg %p92
        %p321 = pneg %p116
        %p322 = pneg %p113
        %p323 = pneg %p137
        %p324 = pneg %p134
        %p325 = pneg %p158
        %p326 = pneg %p155
        %p327 = pneg %p184
        %p328 = pneg %p181
        %s329 = sand.u32 %s171, 1
        %s330 = scalar_lea.sflag [#allocation4], %s329
        %s331 = sand.u32 %s171, 1
        %s332 = smul.addr %s331, 16
        %s333 = scalar_lea.vmem [#allocation10], %s332
        %v334 = vld [vmem:[%s292] sm:$0xff]
        %v336 = vcombine.high %v334, %v334
        %338 = vst [vmem:[%s333] sm:$0xf] %v334
        %339 = vst [vmem:[%s333 + $0x8] sm:$0xf] %v336
        %v340 = vld [vmem:[%s4] sm:$0xf]
        %v341 = vld [vmem:[%s5] sm:$0x3]
        %343 = vset.pattern.permute.xlu0 0
        %344 = vperm.xlu0 %343, %v340
        %v345 = vpop.permute.xlu0 %344
        %v348 = vlaneseq
        %v349 = vshrl.u32 %v348, 7
        %v350 = vsub.s32 0, %v349
        %v351 = vrot.slane %v341, %v350
        %v352 = vlaneseq
        %v353 = vshrl.u32 %v352, 7
        %v354 = vsub.s32 1, %v353
        %v355 = vrot.slane %v341, %v354
        %v358 = vmul.f32 %v345, %v351
        %v359 = vmul.f32 %v345, %v355
        %v360 = vld [vmem:[%s283] sm:$0xf]
        %v361 = vld [vmem:[#allocation7] sm:$0xf]
        %vm362 = vcmask 31744
        %v364 = vsel %vm362, %v361, 0
        %vm366 = vcmask 1043456
        %v368 = vsel %vm366, %v360, 0
        %370 = vmatprep.subr.mxu0 0.0
        %371 = vmatpush1.msra.mxu0 %v368
        %372 = vmatprep.subr.mxu0 0.0
        %373 = vmatpush1.msra.mxu0 0.0
        %374 = vmatprep.subr.mxu0 0.0
        %375 = vmatpush1.msra.mxu0 0.0
        %376 = vmatprep.subr.mxu0 0.0
        %377 = vmatpush1.msra.mxu0 0.0
        %378 = vmatprep.subr.mxu0 0.0
        %379 = vmatpush1.msra.mxu0 0.0
        %380 = vmatprep.subr.mxu0 0.0
        %381 = vmatpush1.msra.mxu0 0.0
        %382 = vmatprep.subr.mxu0 0.0
        %383 = vmatpush1.msra.mxu0 0.0
        %384 = vmatprep.subr.mxu0 0.0
        %385 = vmatpush1.msra.mxu0 0.0
        %386 = vmatprep.subr.mxu0 0.0
        %387 = vmatpush1.msra.mxu0 0.0
        %388 = vmatprep.subr.mxu0 0.0
        %389 = vmatpush1.msra.mxu0 0.0
        %390 = vmatprep.subr.mxu0 0.0
        %391 = vmatpush1.msra.mxu0 0.0
        %392 = vmatprep.subr.mxu0 0.0
        %393 = vmatpush1.msra.mxu0 0.0
        %394 = vmatprep.subr.mxu0 0.0
        %395 = vmatpush1.msra.mxu0 0.0
        %396 = vmatprep.subr.mxu0 0.0
        %397 = vmatpush1.msra.mxu0 0.0
        %398 = vmatprep.subr.mxu0 0.0
        %399 = vmatpush1.msra.mxu0 0.0
        %400 = vmatprep.subr.mxu0 0.0
        %401 = vmatpush1.msra.mxu0 0.0
        %402 = vmatprep.subr.mxu0 0.0
        %403 = vmatpush1.msra.mxu0 0.0
        %404 = vmatprep.subr.mxu0 0.0
        %405 = vmatpush1.msra.mxu0 0.0
        %406 = vmatprep.subr.mxu0 0.0
        %407 = vmatpush1.msra.mxu0 0.0
        %408 = vmatprep.subr.mxu0 0.0
        %409 = vmatpush1.msra.mxu0 0.0
        %410 = vmatprep.subr.mxu0 0.0
        %411 = vmatpush1.msra.mxu0 0.0
        %412 = vmatprep.subr.mxu0 0.0
        %413 = vmatpush1.msra.mxu0 0.0
        %414 = vmatprep.subr.mxu0 0.0
        %415 = vmatpush1.msra.mxu0 0.0
        %416 = vmatprep.subr.mxu0 0.0
        %417 = vmatpush1.msra.mxu0 0.0
        %418 = vmatprep.subr.mxu0 0.0
        %419 = vmatpush1.msra.mxu0 0.0
        %420 = vmatprep.subr.mxu0 0.0
        %421 = vmatpush1.msra.mxu0 0.0
        %422 = vmatprep.subr.mxu0 0.0
        %423 = vmatpush1.msra.mxu0 0.0
        %424 = vmatprep.subr.mxu0 0.0
        %425 = vmatpush1.msra.mxu0 0.0
        %426 = vmatprep.subr.mxu0 0.0
        %427 = vmatpush1.msra.mxu0 0.0
        %428 = vmatprep.subr.mxu0 0.0
        %429 = vmatpush1.msra.mxu0 0.0
        %430 = vmatprep.subr.mxu0 0.0
        %431 = vmatpush1.msra.mxu0 0.0
        %432 = vmatprep.subr.mxu0 0.0
        %433 = vmatpush1.msra.mxu0 0.0
        %434 = vmatprep.mubr.f32.mxu0 0.0
        %435 = vmatmul.mubr.f32.gmra.mrb[0].mxu0 %v364
        %v436 = vpop.f32.mrb[0].mxu0
        %v437 = vadd.f32 0.0, %v436
        %v438 = vpop.f32.mrb[0].mxu0
        %439 = vdwg.mxu0
        %v440 = vld [vmem:[#allocation8] sm:$0xff]
        %v441 = vld [vmem:[#allocation8 + $0x8] sm:$0xff]
        %v442 = vld [vmem:[#allocation8 + $0x10] sm:$0xff]
        %v443 = vld [vmem:[#allocation8 + $0x18] sm:$0xff]
        %v444 = vld [vmem:[#allocation8 + $0x20] sm:$0xff]
        %v445 = vld [vmem:[#allocation8 + $0x28] sm:$0xff]
        %v446 = vld [vmem:[#allocation8 + $0x30] sm:$0xff]
        %v447 = vld [vmem:[#allocation8 + $0x38] sm:$0xff]
        %v448 = vld [vmem:[#allocation8 + $0x40] sm:$0xff]
        %v449 = vld [vmem:[#allocation8 + $0x48] sm:$0xff]
        %v450 = vld [vmem:[#allocation8 + $0x50] sm:$0xff]
        %v451 = vld [vmem:[#allocation8 + $0x58] sm:$0xff]
        %v452 = vld [vmem:[#allocation8 + $0x60] sm:$0xff]
        %v453 = vld [vmem:[#allocation8 + $0x68] sm:$0xff]
        %v454 = vld [vmem:[#allocation8 + $0x70] sm:$0xff]
        %v455 = vld [vmem:[#allocation8 + $0x78] sm:$0xff]
        %vm456 = vcmask 523264
        %v458 = vsel %vm456, %v437, 0
        %460 = vmatprep.subr.mxu0 %v441
        %461 = vmatpush1.msra.mxu0 %v440
        %462 = vmatprep.subr.mxu0 %v443
        %463 = vmatpush1.msra.mxu0 %v442
        %464 = vmatprep.subr.mxu0 %v445
        %465 = vmatpush1.msra.mxu0 %v444
        %466 = vmatprep.subr.mxu0 %v447
        %467 = vmatpush1.msra.mxu0 %v446
        %468 = vmatprep.subr.mxu0 %v449
        %469 = vmatpush1.msra.mxu0 %v448
        %470 = vmatprep.subr.mxu0 %v451
        %471 = vmatpush1.msra.mxu0 %v450
        %472 = vmatprep.subr.mxu0 %v453
        %473 = vmatpush1.msra.mxu0 %v452
        %474 = vmatprep.subr.mxu0 %v455
        %475 = vmatpush1.msra.mxu0 %v454
        %476 = vmatprep.subr.mxu0 0.0
        %477 = vmatpush1.msra.mxu0 0.0
        %478 = vmatprep.subr.mxu0 0.0
        %479 = vmatpush1.msra.mxu0 0.0
        %480 = vmatprep.subr.mxu0 0.0
        %481 = vmatpush1.msra.mxu0 0.0
        %482 = vmatprep.subr.mxu0 0.0
        %483 = vmatpush1.msra.mxu0 0.0
        %484 = vmatprep.subr.mxu0 0.0
        %485 = vmatpush1.msra.mxu0 0.0
        %486 = vmatprep.subr.mxu0 0.0
        %487 = vmatpush1.msra.mxu0 0.0
        %488 = vmatprep.subr.mxu0 0.0
        %489 = vmatpush1.msra.mxu0 0.0
        %490 = vmatprep.subr.mxu0 0.0
        %491 = vmatpush1.msra.mxu0 0.0
        %492 = vmatprep.subr.mxu0 0.0
        %493 = vmatpush1.msra.mxu0 0.0
        %494 = vmatprep.subr.mxu0 0.0
        %495 = vmatpush1.msra.mxu0 0.0
        %496 = vmatprep.subr.mxu0 0.0
        %497 = vmatpush1.msra.mxu0 0.0
        %498 = vmatprep.subr.mxu0 0.0
        %499 = vmatpush1.msra.mxu0 0.0
        %500 = vmatprep.subr.mxu0 0.0
        %501 = vmatpush1.msra.mxu0 0.0
        %502 = vmatprep.subr.mxu0 0.0
        %503 = vmatpush1.msra.mxu0 0.0
        %504 = vmatprep.subr.mxu0 0.0
        %505 = vmatpush1.msra.mxu0 0.0
        %506 = vmatprep.subr.mxu0 0.0
        %507 = vmatpush1.msra.mxu0 0.0
        %508 = vmatprep.subr.mxu0 0.0
        %509 = vmatpush1.msra.mxu0 0.0
        %510 = vmatprep.subr.mxu0 0.0
        %511 = vmatpush1.msra.mxu0 0.0
        %512 = vmatprep.subr.mxu0 0.0
        %513 = vmatpush1.msra.mxu0 0.0
        %514 = vmatprep.subr.mxu0 0.0
        %515 = vmatpush1.msra.mxu0 0.0
        %516 = vmatprep.subr.mxu0 0.0
        %517 = vmatpush1.msra.mxu0 0.0
        %518 = vmatprep.subr.mxu0 0.0
        %519 = vmatpush1.msra.mxu0 0.0
        %520 = vmatprep.subr.mxu0 0.0
        %521 = vmatpush1.msra.mxu0 0.0
        %522 = vmatprep.subr.mxu0 0.0
        %523 = vmatpush1.msra.mxu0 0.0
        %524 = vmatprep.mubr.f32.mxu0 0.0
        %525 = vmatmul.mubr.f32.gmra.mrb[0].mxu0 %v458
        %v526 = vpop.f32.mrb[0].mxu0
        %v527 = vadd.f32 0.0, %v526
        %v528 = vpop.f32.mrb[0].mxu0
        %v529 = vadd.f32 0.0, %v528
        %530 = vdwg.mxu0
        %v531 = vadd.f32 %v358, %v527
        %v532 = vadd.f32 %v359, %v529
        %s533 = scalar_lea.vmem [#allocation7], 4
        %v534 = vld [vmem:[%s533] sm:$0xf]
        %v536 = vsel %vm362, %v534, 0
        %538 = vmatprep.subr.mxu0 0.0
        %539 = vmatpush1.msra.mxu0 %v368
        %540 = vmatprep.subr.mxu0 0.0
        %541 = vmatpush1.msra.mxu0 0.0
        %542 = vmatprep.subr.mxu0 0.0
        %543 = vmatpush1.msra.mxu0 0.0
        %544 = vmatprep.subr.mxu0 0.0
        %545 = vmatpush1.msra.mxu0 0.0
        %546 = vmatprep.subr.mxu0 0.0
        %547 = vmatpush1.msra.mxu0 0.0
        %548 = vmatprep.subr.mxu0 0.0
        %549 = vmatpush1.msra.mxu0 0.0
        %550 = vmatprep.subr.mxu0 0.0
        %551 = vmatpush1.msra.mxu0 0.0
        %552 = vmatprep.subr.mxu0 0.0
        %553 = vmatpush1.msra.mxu0 0.0
        %554 = vmatprep.subr.mxu0 0.0
        %555 = vmatpush1.msra.mxu0 0.0
        %556 = vmatprep.subr.mxu0 0.0
        %557 = vmatpush1.msra.mxu0 0.0
        %558 = vmatprep.subr.mxu0 0.0
        %559 = vmatpush1.msra.mxu0 0.0
        %560 = vmatprep.subr.mxu0 0.0
        %561 = vmatpush1.msra.mxu0 0.0
        %562 = vmatprep.subr.mxu0 0.0
        %563 = vmatpush1.msra.mxu0 0.0
        %564 = vmatprep.subr.mxu0 0.0
        %565 = vmatpush1.msra.mxu0 0.0
        %566 = vmatprep.subr.mxu0 0.0
        %567 = vmatpush1.msra.mxu0 0.0
        %568 = vmatprep.subr.mxu0 0.0
        %569 = vmatpush1.msra.mxu0 0.0
        %570 = vmatprep.subr.mxu0 0.0
        %571 = vmatpush1.msra.mxu0 0.0
        %572 = vmatprep.subr.mxu0 0.0
        %573 = vmatpush1.msra.mxu0 0.0
        %574 = vmatprep.subr.mxu0 0.0
        %575 = vmatpush1.msra.mxu0 0.0
        %576 = vmatprep.subr.mxu0 0.0
        %577 = vmatpush1.msra.mxu0 0.0
        %578 = vmatprep.subr.mxu0 0.0
        %579 = vmatpush1.msra.mxu0 0.0
        %580 = vmatprep.subr.mxu0 0.0
        %581 = vmatpush1.msra.mxu0 0.0
        %582 = vmatprep.subr.mxu0 0.0
        %583 = vmatpush1.msra.mxu0 0.0
        %584 = vmatprep.subr.mxu0 0.0
        %585 = vmatpush1.msra.mxu0 0.0
        %586 = vmatprep.subr.mxu0 0.0
        %587 = vmatpush1.msra.mxu0 0.0
        %588 = vmatprep.subr.mxu0 0.0
        %589 = vmatpush1.msra.mxu0 0.0
        %590 = vmatprep.subr.mxu0 0.0
        %591 = vmatpush1.msra.mxu0 0.0
        %592 = vmatprep.subr.mxu0 0.0
        %593 = vmatpush1.msra.mxu0 0.0
        %594 = vmatprep.subr.mxu0 0.0
        %595 = vmatpush1.msra.mxu0 0.0
        %596 = vmatprep.subr.mxu0 0.0
        %597 = vmatpush1.msra.mxu0 0.0
        %598 = vmatprep.subr.mxu0 0.0
        %599 = vmatpush1.msra.mxu0 0.0
        %600 = vmatprep.subr.mxu0 0.0
        %601 = vmatpush1.msra.mxu0 0.0
        %602 = vmatprep.mubr.f32.mxu0 0.0
        %603 = vmatmul.mubr.f32.gmra.mrb[0].mxu0 %v536
        %v604 = vpop.f32.mrb[0].mxu0
        %v605 = vadd.f32 0.0, %v604
        %v606 = vpop.f32.mrb[0].mxu0
        %607 = vdwg.mxu0
        %s608 = scalar_lea.vmem [#allocation8], 128
        %v609 = vld [vmem:[%s608] sm:$0xff]
        %v610 = vld [vmem:[%s608 + $0x8] sm:$0xff]
        %v611 = vld [vmem:[%s608 + $0x10] sm:$0xff]
        %v612 = vld [vmem:[%s608 + $0x18] sm:$0xff]
        %v613 = vld [vmem:[%s608 + $0x20] sm:$0xff]
        %v614 = vld [vmem:[%s608 + $0x28] sm:$0xff]
        %v615 = vld [vmem:[%s608 + $0x30] sm:$0xff]
        %v616 = vld [vmem:[%s608 + $0x38] sm:$0xff]
        %v617 = vld [vmem:[%s608 + $0x40] sm:$0xff]
        %v618 = vld [vmem:[%s608 + $0x48] sm:$0xff]
        %v619 = vld [vmem:[%s608 + $0x50] sm:$0xff]
        %v620 = vld [vmem:[%s608 + $0x58] sm:$0xff]
        %v621 = vld [vmem:[%s608 + $0x60] sm:$0xff]
        %v622 = vld [vmem:[%s608 + $0x68] sm:$0xff]
        %v623 = vld [vmem:[%s608 + $0x70] sm:$0xff]
        %v624 = vld [vmem:[%s608 + $0x78] sm:$0xff]
        %v626 = vsel %vm456, %v605, 0
        %628 = vmatprep.subr.mxu0 %v610
        %629 = vmatpush1.msra.mxu0 %v609
        %630 = vmatprep.subr.mxu0 %v612
        %631 = vmatpush1.msra.mxu0 %v611
        %632 = vmatprep.subr.mxu0 %v614
        %633 = vmatpush1.msra.mxu0 %v613
        %634 = vmatprep.subr.mxu0 %v616
        %635 = vmatpush1.msra.mxu0 %v615
        %636 = vmatprep.subr.mxu0 %v618
        %637 = vmatpush1.msra.mxu0 %v617
        %638 = vmatprep.subr.mxu0 %v620
        %639 = vmatpush1.msra.mxu0 %v619
        %640 = vmatprep.subr.mxu0 %v622
        %641 = vmatpush1.msra.mxu0 %v621
        %642 = vmatprep.subr.mxu0 %v624
        %643 = vmatpush1.msra.mxu0 %v623
        %644 = vmatprep.subr.mxu0 0.0
        %645 = vmatpush1.msra.mxu0 0.0
        %646 = vmatprep.subr.mxu0 0.0
        %647 = vmatpush1.msra.mxu0 0.0
        %648 = vmatprep.subr.mxu0 0.0
        %649 = vmatpush1.msra.mxu0 0.0
        %650 = vmatprep.subr.mxu0 0.0
        %651 = vmatpush1.msra.mxu0 0.0
        %652 = vmatprep.subr.mxu0 0.0
        %653 = vmatpush1.msra.mxu0 0.0
        %654 = vmatprep.subr.mxu0 0.0
        %655 = vmatpush1.msra.mxu0 0.0
        %656 = vmatprep.subr.mxu0 0.0
        %657 = vmatpush1.msra.mxu0 0.0
        %658 = vmatprep.subr.mxu0 0.0
        %659 = vmatpush1.msra.mxu0 0.0
        %660 = vmatprep.subr.mxu0 0.0
        %661 = vmatpush1.msra.mxu0 0.0
        %662 = vmatprep.subr.mxu0 0.0
        %663 = vmatpush1.msra.mxu0 0.0
        %664 = vmatprep.subr.mxu0 0.0
        %665 = vmatpush1.msra.mxu0 0.0
        %666 = vmatprep.subr.mxu0 0.0
        %667 = vmatpush1.msra.mxu0 0.0
        %668 = vmatprep.subr.mxu0 0.0
        %669 = vmatpush1.msra.mxu0 0.0
        %670 = vmatprep.subr.mxu0 0.0
        %671 = vmatpush1.msra.mxu0 0.0
        %672 = vmatprep.subr.mxu0 0.0
        %673 = vmatpush1.msra.mxu0 0.0
        %674 = vmatprep.subr.mxu0 0.0
        %675 = vmatpush1.msra.mxu0 0.0
        %676 = vmatprep.subr.mxu0 0.0
        %677 = vmatpush1.msra.mxu0 0.0
        %678 = vmatprep.subr.mxu0 0.0
        %679 = vmatpush1.msra.mxu0 0.0
        %680 = vmatprep.subr.mxu0 0.0
        %681 = vmatpush1.msra.mxu0 0.0
        %682 = vmatprep.subr.mxu0 0.0
        %683 = vmatpush1.msra.mxu0 0.0
        %684 = vmatprep.subr.mxu0 0.0
        %685 = vmatpush1.msra.mxu0 0.0
        %686 = vmatprep.subr.mxu0 0.0
        %687 = vmatpush1.msra.mxu0 0.0
        %688 = vmatprep.subr.mxu0 0.0
        %689 = vmatpush1.msra.mxu0 0.0
        %690 = vmatprep.subr.mxu0 0.0
        %691 = vmatpush1.msra.mxu0 0.0
        %692 = vmatprep.mubr.f32.mxu0 0.0
        %693 = vmatmul.mubr.f32.gmra.mrb[0].mxu0 %v626
        %v694 = vpop.f32.mrb[0].mxu0
        %v695 = vadd.f32 0.0, %v694
        %v696 = vpop.f32.mrb[0].mxu0
        %v697 = vadd.f32 0.0, %v696
        %698 = vdwg.mxu0
        %v699 = vadd.f32 %v531, %v695
        %v700 = vadd.f32 %v532, %v697
        %s701 = scalar_lea.vmem [#allocation7], 8
        %v702 = vld [vmem:[%s701] sm:$0xf]
        %v704 = vsel %vm362, %v702, 0
        %706 = vmatprep.subr.mxu0 0.0
        %707 = vmatpush1.msra.mxu0 %v368
        %708 = vmatprep.subr.mxu0 0.0
        %709 = vmatpush1.msra.mxu0 0.0
        %710 = vmatprep.subr.mxu0 0.0
        %711 = vmatpush1.msra.mxu0 0.0
        %712 = vmatprep.subr.mxu0 0.0
        %713 = vmatpush1.msra.mxu0 0.0
        %714 = vmatprep.subr.mxu0 0.0
        %715 = vmatpush1.msra.mxu0 0.0
        %716 = vmatprep.subr.mxu0 0.0
        %717 = vmatpush1.msra.mxu0 0.0
        %718 = vmatprep.subr.mxu0 0.0
        %719 = vmatpush1.msra.mxu0 0.0
        %720 = vmatprep.subr.mxu0 0.0
        %721 = vmatpush1.msra.mxu0 0.0
        %722 = vmatprep.subr.mxu0 0.0
        %723 = vmatpush1.msra.mxu0 0.0
        %724 = vmatprep.subr.mxu0 0.0
        %725 = vmatpush1.msra.mxu0 0.0
        %726 = vmatprep.subr.mxu0 0.0
        %727 = vmatpush1.msra.mxu0 0.0
        %728 = vmatprep.subr.mxu0 0.0
        %729 = vmatpush1.msra.mxu0 0.0
        %730 = vmatprep.subr.mxu0 0.0
        %731 = vmatpush1.msra.mxu0 0.0
        %732 = vmatprep.subr.mxu0 0.0
        %733 = vmatpush1.msra.mxu0 0.0
        %734 = vmatprep.subr.mxu0 0.0
        %735 = vmatpush1.msra.mxu0 0.0
        %736 = vmatprep.subr.mxu0 0.0
        %737 = vmatpush1.msra.mxu0 0.0
        %738 = vmatprep.subr.mxu0 0.0
        %739 = vmatpush1.msra.mxu0 0.0
        %740 = vmatprep.subr.mxu0 0.0
        %741 = vmatpush1.msra.mxu0 0.0
        %742 = vmatprep.subr.mxu0 0.0
        %743 = vmatpush1.msra.mxu0 0.0
        %744 = vmatprep.subr.mxu0 0.0
        %745 = vmatpush1.msra.mxu0 0.0
        %746 = vmatprep.subr.mxu0 0.0
        %747 = vmatpush1.msra.mxu0 0.0
        %748 = vmatprep.subr.mxu0 0.0
        %749 = vmatpush1.msra.mxu0 0.0
        %750 = vmatprep.subr.mxu0 0.0
        %751 = vmatpush1.msra.mxu0 0.0
        %752 = vmatprep.subr.mxu0 0.0
        %753 = vmatpush1.msra.mxu0 0.0
        %754 = vmatprep.subr.mxu0 0.0
        %755 = vmatpush1.msra.mxu0 0.0
        %756 = vmatprep.subr.mxu0 0.0
        %757 = vmatpush1.msra.mxu0 0.0
        %758 = vmatprep.subr.mxu0 0.0
        %759 = vmatpush1.msra.mxu0 0.0
        %760 = vmatprep.subr.mxu0 0.0
        %761 = vmatpush1.msra.mxu0 0.0
        %762 = vmatprep.subr.mxu0 0.0
        %763 = vmatpush1.msra.mxu0 0.0
        %764 = vmatprep.subr.mxu0 0.0
        %765 = vmatpush1.msra.mxu0 0.0
        %766 = vmatprep.subr.mxu0 0.0
        %767 = vmatpush1.msra.mxu0 0.0
        %768 = vmatprep.subr.mxu0 0.0
        %769 = vmatpush1.msra.mxu0 0.0
        %770 = vmatprep.mubr.f32.mxu0 0.0
        %771 = vmatmul.mubr.f32.gmra.mrb[0].mxu0 %v704
        %v772 = vpop.f32.mrb[0].mxu0
        %v773 = vadd.f32 0.0, %v772
        %v774 = vpop.f32.mrb[0].mxu0
        %775 = vdwg.mxu0
        %s776 = scalar_lea.vmem [#allocation8], 256
        %v777 = vld [vmem:[%s776] sm:$0xff]
        %v778 = vld [vmem:[%s776 + $0x8] sm:$0xff]
        %v779 = vld [vmem:[%s776 + $0x10] sm:$0xff]
        %v780 = vld [vmem:[%s776 + $0x18] sm:$0xff]
        %v781 = vld [vmem:[%s776 + $0x20] sm:$0xff]
        %v782 = vld [vmem:[%s776 + $0x28] sm:$0xff]
        %v783 = vld [vmem:[%s776 + $0x30] sm:$0xff]
        %v784 = vld [vmem:[%s776 + $0x38] sm:$0xff]
        %v785 = vld [vmem:[%s776 + $0x40] sm:$0xff]
        %v786 = vld [vmem:[%s776 + $0x48] sm:$0xff]
        %v787 = vld [vmem:[%s776 + $0x50] sm:$0xff]
        %v788 = vld [vmem:[%s776 + $0x58] sm:$0xff]
        %v789 = vld [vmem:[%s776 + $0x60] sm:$0xff]
        %v790 = vld [vmem:[%s776 + $0x68] sm:$0xff]
        %v791 = vld [vmem:[%s776 + $0x70] sm:$0xff]
        %v792 = vld [vmem:[%s776 + $0x78] sm:$0xff]
        %v794 = vsel %vm456, %v773, 0
        %796 = vmatprep.subr.mxu0 %v778
        %797 = vmatpush1.msra.mxu0 %v777
        %798 = vmatprep.subr.mxu0 %v780
        %799 = vmatpush1.msra.mxu0 %v779
        %800 = vmatprep.subr.mxu0 %v782
        %801 = vmatpush1.msra.mxu0 %v781
        %802 = vmatprep.subr.mxu0 %v784
        %803 = vmatpush1.msra.mxu0 %v783
        %804 = vmatprep.subr.mxu0 %v786
        %805 = vmatpush1.msra.mxu0 %v785
        %806 = vmatprep.subr.mxu0 %v788
        %807 = vmatpush1.msra.mxu0 %v787
        %808 = vmatprep.subr.mxu0 %v790
        %809 = vmatpush1.msra.mxu0 %v789
        %810 = vmatprep.subr.mxu0 %v792
        %811 = vmatpush1.msra.mxu0 %v791
        %812 = vmatprep.subr.mxu0 0.0
        %813 = vmatpush1.msra.mxu0 0.0
        %814 = vmatprep.subr.mxu0 0.0
        %815 = vmatpush1.msra.mxu0 0.0
        %816 = vmatprep.subr.mxu0 0.0
        %817 = vmatpush1.msra.mxu0 0.0
        %818 = vmatprep.subr.mxu0 0.0
        %819 = vmatpush1.msra.mxu0 0.0
        %820 = vmatprep.subr.mxu0 0.0
        %821 = vmatpush1.msra.mxu0 0.0
        %822 = vmatprep.subr.mxu0 0.0
        %823 = vmatpush1.msra.mxu0 0.0
        %824 = vmatprep.subr.mxu0 0.0
        %825 = vmatpush1.msra.mxu0 0.0
        %826 = vmatprep.subr.mxu0 0.0
        %827 = vmatpush1.msra.mxu0 0.0
        %828 = vmatprep.subr.mxu0 0.0
        %829 = vmatpush1.msra.mxu0 0.0
        %830 = vmatprep.subr.mxu0 0.0
        %831 = vmatpush1.msra.mxu0 0.0
        %832 = vmatprep.subr.mxu0 0.0
        %833 = vmatpush1.msra.mxu0 0.0
        %834 = vmatprep.subr.mxu0 0.0
        %835 = vmatpush1.msra.mxu0 0.0
        %836 = vmatprep.subr.mxu0 0.0
        %837 = vmatpush1.msra.mxu0 0.0
        %838 = vmatprep.subr.mxu0 0.0
        %839 = vmatpush1.msra.mxu0 0.0
        %840 = vmatprep.subr.mxu0 0.0
        %841 = vmatpush1.msra.mxu0 0.0
        %842 = vmatprep.subr.mxu0 0.0
        %843 = vmatpush1.msra.mxu0 0.0
        %844 = vmatprep.subr.mxu0 0.0
        %845 = vmatpush1.msra.mxu0 0.0
        %846 = vmatprep.subr.mxu0 0.0
        %847 = vmatpush1.msra.mxu0 0.0
        %848 = vmatprep.subr.mxu0 0.0
        %849 = vmatpush1.msra.mxu0 0.0
        %850 = vmatprep.subr.mxu0 0.0
        %851 = vmatpush1.msra.mxu0 0.0
        %852 = vmatprep.subr.mxu0 0.0
        %853 = vmatpush1.msra.mxu0 0.0
        %854 = vmatprep.subr.mxu0 0.0
        %855 = vmatpush1.msra.mxu0 0.0
        %856 = vmatprep.subr.mxu0 0.0
        %857 = vmatpush1.msra.mxu0 0.0
        %858 = vmatprep.subr.mxu0 0.0
        %859 = vmatpush1.msra.mxu0 0.0
        %860 = vmatprep.mubr.f32.mxu0 0.0
        %861 = vmatmul.mubr.f32.gmra.mrb[0].mxu0 %v794
        %v862 = vpop.f32.mrb[0].mxu0
        %v863 = vadd.f32 0.0, %v862
        %v864 = vpop.f32.mrb[0].mxu0
        %v865 = vadd.f32 0.0, %v864
        %866 = vdwg.mxu0
        %v867 = vadd.f32 %v699, %v863
        %v868 = vadd.f32 %v700, %v865
        %s869 = scalar_lea.vmem [#allocation7], 12
        %v870 = vld [vmem:[%s869] sm:$0xf]
        %v872 = vsel %vm362, %v870, 0
        %874 = vmatprep.subr.mxu0 0.0
        %875 = vmatpush1.msra.mxu0 %v368
        %876 = vmatprep.subr.mxu0 0.0
        %877 = vmatpush1.msra.mxu0 0.0
        %878 = vmatprep.subr.mxu0 0.0
        %879 = vmatpush1.msra.mxu0 0.0
        %880 = vmatprep.subr.mxu0 0.0
        %881 = vmatpush1.msra.mxu0 0.0
        %882 = vmatprep.subr.mxu0 0.0
        %883 = vmatpush1.msra.mxu0 0.0
        %884 = vmatprep.subr.mxu0 0.0
        %885 = vmatpush1.msra.mxu0 0.0
        %886 = vmatprep.subr.mxu0 0.0
        %887 = vmatpush1.msra.mxu0 0.0
        %888 = vmatprep.subr.mxu0 0.0
        %889 = vmatpush1.msra.mxu0 0.0
        %890 = vmatprep.subr.mxu0 0.0
        %891 = vmatpush1.msra.mxu0 0.0
        %892 = vmatprep.subr.mxu0 0.0
        %893 = vmatpush1.msra.mxu0 0.0
        %894 = vmatprep.subr.mxu0 0.0
        %895 = vmatpush1.msra.mxu0 0.0
        %896 = vmatprep.subr.mxu0 0.0
        %897 = vmatpush1.msra.mxu0 0.0
        %898 = vmatprep.subr.mxu0 0.0
        %899 = vmatpush1.msra.mxu0 0.0
        %900 = vmatprep.subr.mxu0 0.0
        %901 = vmatpush1.msra.mxu0 0.0
        %902 = vmatprep.subr.mxu0 0.0
        %903 = vmatpush1.msra.mxu0 0.0
        %904 = vmatprep.subr.mxu0 0.0
        %905 = vmatpush1.msra.mxu0 0.0
        %906 = vmatprep.subr.mxu0 0.0
        %907 = vmatpush1.msra.mxu0 0.0
        %908 = vmatprep.subr.mxu0 0.0
        %909 = vmatpush1.msra.mxu0 0.0
        %910 = vmatprep.subr.mxu0 0.0
        %911 = vmatpush1.msra.mxu0 0.0
        %912 = vmatprep.subr.mxu0 0.0
        %913 = vmatpush1.msra.mxu0 0.0
        %914 = vmatprep.subr.mxu0 0.0
        %915 = vmatpush1.msra.mxu0 0.0
        %916 = vmatprep.subr.mxu0 0.0
        %917 = vmatpush1.msra.mxu0 0.0
        %918 = vmatprep.subr.mxu0 0.0
        %919 = vmatpush1.msra.mxu0 0.0
        %920 = vmatprep.subr.mxu0 0.0
        %921 = vmatpush1.msra.mxu0 0.0
        %922 = vmatprep.subr.mxu0 0.0
        %923 = vmatpush1.msra.mxu0 0.0
        %924 = vmatprep.subr.mxu0 0.0
        %925 = vmatpush1.msra.mxu0 0.0
        %926 = vmatprep.subr.mxu0 0.0
        %927 = vmatpush1.msra.mxu0 0.0
        %928 = vmatprep.subr.mxu0 0.0
        %929 = vmatpush1.msra.mxu0 0.0
        %930 = vmatprep.subr.mxu0 0.0
        %931 = vmatpush1.msra.mxu0 0.0
        %932 = vmatprep.subr.mxu0 0.0
        %933 = vmatpush1.msra.mxu0 0.0
        %934 = vmatprep.subr.mxu0 0.0
        %935 = vmatpush1.msra.mxu0 0.0
        %936 = vmatprep.subr.mxu0 0.0
        %937 = vmatpush1.msra.mxu0 0.0
        %938 = vmatprep.mubr.f32.mxu0 0.0
        %939 = vmatmul.mubr.f32.gmra.mrb[0].mxu0 %v872
        %v940 = vpop.f32.mrb[0].mxu0
        %v941 = vadd.f32 0.0, %v940
        %v942 = vpop.f32.mrb[0].mxu0
        %943 = vdwg.mxu0
        %s944 = scalar_lea.vmem [#allocation8], 384
        %v945 = vld [vmem:[%s944] sm:$0xff]
        %v946 = vld [vmem:[%s944 + $0x8] sm:$0xff]
        %v947 = vld [vmem:[%s944 + $0x10] sm:$0xff]
        %v948 = vld [vmem:[%s944 + $0x18] sm:$0xff]
        %v949 = vld [vmem:[%s944 + $0x20] sm:$0xff]
        %v950 = vld [vmem:[%s944 + $0x28] sm:$0xff]
        %v951 = vld [vmem:[%s944 + $0x30] sm:$0xff]
        %v952 = vld [vmem:[%s944 + $0x38] sm:$0xff]
        %v953 = vld [vmem:[%s944 + $0x40] sm:$0xff]
        %v954 = vld [vmem:[%s944 + $0x48] sm:$0xff]
        %v955 = vld [vmem:[%s944 + $0x50] sm:$0xff]
        %v956 = vld [vmem:[%s944 + $0x58] sm:$0xff]
        %v957 = vld [vmem:[%s944 + $0x60] sm:$0xff]
        %v958 = vld [vmem:[%s944 + $0x68] sm:$0xff]
        %v959 = vld [vmem:[%s944 + $0x70] sm:$0xff]
        %v960 = vld [vmem:[%s944 + $0x78] sm:$0xff]
        %v962 = vsel %vm456, %v941, 0
        %964 = vmatprep.subr.mxu0 %v946
        %965 = vmatpush1.msra.mxu0 %v945
        %966 = vmatprep.subr.mxu0 %v948
        %967 = vmatpush1.msra.mxu0 %v947
        %968 = vmatprep.subr.mxu0 %v950
        %969 = vmatpush1.msra.mxu0 %v949
        %970 = vmatprep.subr.mxu0 %v952
        %971 = vmatpush1.msra.mxu0 %v951
        %972 = vmatprep.subr.mxu0 %v954
        %973 = vmatpush1.msra.mxu0 %v953
        %974 = vmatprep.subr.mxu0 %v956
        %975 = vmatpush1.msra.mxu0 %v955
        %976 = vmatprep.subr.mxu0 %v958
        %977 = vmatpush1.msra.mxu0 %v957
        %978 = vmatprep.subr.mxu0 %v960
        %979 = vmatpush1.msra.mxu0 %v959
        %980 = vmatprep.subr.mxu0 0.0
        %981 = vmatpush1.msra.mxu0 0.0
        %982 = vmatprep.subr.mxu0 0.0
        %983 = vmatpush1.msra.mxu0 0.0
        %984 = vmatprep.subr.mxu0 0.0
        %985 = vmatpush1.msra.mxu0 0.0
        %986 = vmatprep.subr.mxu0 0.0
        %987 = vmatpush1.msra.mxu0 0.0
        %988 = vmatprep.subr.mxu0 0.0
        %989 = vmatpush1.msra.mxu0 0.0
        %990 = vmatprep.subr.mxu0 0.0
        %991 = vmatpush1.msra.mxu0 0.0
        %992 = vmatprep.subr.mxu0 0.0
        %993 = vmatpush1.msra.mxu0 0.0
        %994 = vmatprep.subr.mxu0 0.0
        %995 = vmatpush1.msra.mxu0 0.0
        %996 = vmatprep.subr.mxu0 0.0
        %997 = vmatpush1.msra.mxu0 0.0
        %998 = vmatprep.subr.mxu0 0.0
        %999 = vmatpush1.msra.mxu0 0.0
        %1000 = vmatprep.subr.mxu0 0.0
        %1001 = vmatpush1.msra.mxu0 0.0
        %1002 = vmatprep.subr.mxu0 0.0
        %1003 = vmatpush1.msra.mxu0 0.0
        %1004 = vmatprep.subr.mxu0 0.0
        %1005 = vmatpush1.msra.mxu0 0.0
        %1006 = vmatprep.subr.mxu0 0.0
        %1007 = vmatpush1.msra.mxu0 0.0
        %1008 = vmatprep.subr.mxu0 0.0
        %1009 = vmatpush1.msra.mxu0 0.0
        %1010 = vmatprep.subr.mxu0 0.0
        %1011 = vmatpush1.msra.mxu0 0.0
        %1012 = vmatprep.subr.mxu0 0.0
        %1013 = vmatpush1.msra.mxu0 0.0
        %1014 = vmatprep.subr.mxu0 0.0
        %1015 = vmatpush1.msra.mxu0 0.0
        %1016 = vmatprep.subr.mxu0 0.0
        %1017 = vmatpush1.msra.mxu0 0.0
        %1018 = vmatprep.subr.mxu0 0.0
        %1019 = vmatpush1.msra.mxu0 0.0
        %1020 = vmatprep.subr.mxu0 0.0
        %1021 = vmatpush1.msra.mxu0 0.0
        %1022 = vmatprep.subr.mxu0 0.0
        %1023 = vmatpush1.msra.mxu0 0.0
        %1024 = vmatprep.subr.mxu0 0.0
        %1025 = vmatpush1.msra.mxu0 0.0
        %1026 = vmatprep.subr.mxu0 0.0
        %1027 = vmatpush1.msra.mxu0 0.0
        %1028 = vmatprep.mubr.f32.mxu0 0.0
        %1029 = vmatmul.mubr.f32.gmra.mrb[0].mxu0 %v962
        %v1030 = vpop.f32.mrb[0].mxu0
        %v1031 = vadd.f32 0.0, %v1030
        %v1032 = vpop.f32.mrb[0].mxu0
        %v1033 = vadd.f32 0.0, %v1032
        %1034 = vdwg.mxu0
        %v1035 = vadd.f32 %v867, %v1031
        %v1036 = vadd.f32 %v868, %v1033
        %v1039 = vrot.slane %v1035, 4
        %v1040 = vrot.slane %v1036, 4
        %1043 = vst [vmem:[%s333] sm:$0xf0] %v1039
        %1044 = vst [vmem:[%s333 + $0x8] sm:$0xf0] %v1040
        %s1045 = sand.u32 %s171, 1
        %s1046 = scalar_lea.sflag [#allocation4], %s1045
        %s1047 = sand.u32 %s171, 1
        %s1048 = smul.addr %s1047, 16
        %s1049 = scalar_lea.vmem [#allocation10], %s1048
        // Predicated region
        $region61: #{tpu_custom_call.1} parent=43 // pred_check
          %p1050 = pneg %p181
        $region62: #{tpu_custom_call.1} parent=43 // pred_check_branch
          %1052 = sbr.rel (%p1050) target = $region64
        $region63: #{tpu_custom_call.1} parent=43 // pred_region
          %s1054 = ssub.s32 256, 256
          %1055 = vsyncadd %s1046, %s1054
          %s1056 = smul.addr %s27, 2
          %s1057 = smul.addr %s1056, 128
          %s1058 = scalar_lea.hbm %s6, %s1057
          %s1060 = sshll.u32 %s1049, 4
          %s1061 = int_to_ptr.vmem [resolvable:$true] %s1060
          %1063 = dma.vmem_to_hbm [thread:$0]  %s1061, 256, %s1058, %s1046
        $region64: #{tpu_custom_call.1} parent=43 // pred_fallthru
          _
      $region44: #{tpu_custom_call.1} parent=5 // pred_fallthru
        _
      %p1064 = scmp.le.s32.totalorder 2, %s22
      // Predicated region
      $region65: #{tpu_custom_call.1} parent=5 // pred_check
        %p1065 = pneg %p1064
      $region66: #{tpu_custom_call.1} parent=5 // pred_check_branch
        %1067 = sbr.rel (%p1065) target = $region68
      $region67: #{tpu_custom_call.1} parent=5 // pred_region
        %s1068 = ssub.s32 %s22, 2
        // Predicated region
        $region69: #{tpu_custom_call.1} parent=67 // pred_check
          %p1069 = pneg %p187
        $region70: #{tpu_custom_call.1} parent=67 // pred_check_branch
          %1071 = sbr.rel (%p1069) target = $region72
        $region71: #{tpu_custom_call.1} parent=67 // pred_region
          %s1072 = sand.u32 %s172, 1
          %s1073 = scalar_lea.sflag [#allocation4], %s1072
          %s1074 = sand.u32 %s172, 1
          %s1075 = smul.addr %s1074, 16
          %s1076 = scalar_lea.vmem [#allocation10], %s1075
          %1077 = dma.done %s1073, 256
        $region72: #{tpu_custom_call.1} parent=67 // pred_fallthru
          _
      $region68: #{tpu_custom_call.1} parent=5 // pred_fallthru
        _
    $region6: #{tpu_custom_call.1} parent=1 // loop_footer
      %s26 = sadd.s32 1, %s22
    $region7: #{tpu_custom_call.1} parent=1 // loop_footer_branch
      %21 = sbr.rel target = $region3
    $region8: #{tpu_custom_call.1} parent=1 // loop_exit
      _
    %1078 = vsyncpa [#allocation3], 1
    %s1079 = scalar_lea.sflag [#allocation3], 1
    %1080 = vsyncpa %s1079, 1
    %1081 = vsyncpa [#allocation6], 1
    %s1082 = scalar_lea.sflag [#allocation6], 1
    %1083 = vsyncpa %s1082, 1
    %1084 = vsyncpa [#allocation9], 1
    %1085 = vsyncpa [#allocation4], 1
    %s1086 = scalar_lea.sflag [#allocation4], 1
    %1087 = vsyncpa %s1086, 1

</llo_original>
